<compile_context>
chip_gen: v6e
topology: v6e:2x2x1
jax: 0.10.0
libtpu: 0.0.40
codegen_flags: <defaults>
</compile_context>

<pallas_src>
import jax
import jax.numpy as jnp
from jax import lax
from jax.experimental import pallas as pl
from jax.experimental.pallas import tpu as pltpu


def _round_up(x, m):
    return (x + m - 1) // m * m


def _tpu_vmem_and_cores():
    """Returns (physical VMEM bytes per TensorCore, assumed TCs per chip)."""
    vmem = 64 << 20  # conservative default (v7x per-TC size)
    try:
        info = pltpu.get_tpu_info()
        cap = getattr(info, "vmem_capacity_bytes", None)
        if cap:
            vmem = int(cap)
    except Exception:
        pass
    # v7x is the generation with <=64 MiB VMEM per TC and 2 TCs/chip;
    # v5e/v6e have 128 MiB and a single TC.
    num_tc = 2 if vmem <= (64 << 20) else 1
    return vmem, num_tc


def attematch_kernel(r_ref, m_ref, w2t_ref, o_ref):
    # r_ref/m_ref: [TM, D]   w2t_ref: [D, mp_pad] (f32, = (weight**2).T padded)
    # o_ref: [TM, mp_pad]
    r = r_ref[...].astype(jnp.float32)
    m = m_ref[...].astype(jnp.float32)
    w2t = w2t_ref[...]                                    # [D, mp_pad]
    tm = r.shape[0]

    # Stack the three elementwise products along rows so the identical RHS
    # (w2t) is pushed into the MXU only once per grid step.
    stacked = jnp.concatenate([r * m, r * r, m * m], axis=0)            # [3*TM, D]
    prods = jnp.dot(stacked, w2t, preferred_element_type=jnp.float32)   # [3*TM, mp_pad]

    numer = prods[:tm]          # (r∘w)·(m∘w)
    sq_r = prods[tm:2 * tm]     # ||r∘w||^2
    sq_m = prods[2 * tm:]       # ||m∘w||^2

    # eps = 1e-8 -> clamp squared norms at eps^2; rsqrt runs on the EUP.
    eps2 = jnp.float32(1e-16)
    inv = lax.rsqrt(jnp.maximum(sq_r, eps2)) * lax.rsqrt(jnp.maximum(sq_m, eps2))
    o_ref[...] = (numer * inv).astype(o_ref.dtype)


def atte_match_lay(repres, max_att, weight, *, tile_rows=None):
    """repres/max_att: [bsz, sent_len, cont_dim]; weight: [mp_dim, cont_dim]."""
    bsz, sent_len, cont_dim = repres.shape
    mp_dim = weight.shape[0]
    n_rows = bsz * sent_len

    in_bytes = jnp.dtype(repres.dtype).itemsize
    out_bytes = in_bytes
    # sublane multiple: 8 for 32-bit inputs, 16 for 16-bit inputs.
    row_mult = 8 if in_bytes >= 4 else 16
    # lane-dense output (unmasked vst); extra lanes are sliced off after.
    mp_pad = _round_up(mp_dim, 128)

    phys_vmem, num_tc = _tpu_vmem_and_cores()
    vmem_limit = min(phys_vmem * 3 // 4, 96 << 20)

    if tile_rows is None:
        # Per-step VMEM budget (bytes), leaving slack for compiler scratch.
        budget = vmem_limit * 7 // 10
        per_row = (2 * 2 * cont_dim * in_bytes      # r, m double-buffered
                   + 2 * cont_dim * 4               # f32 upcasts of r, m
                   + 3 * cont_dim * 4               # stacked products [3*TM, D]
                   + 3 * mp_pad * 4                 # stacked dot result
                   + 2 * mp_pad * out_bytes         # output double-buffered
                   + 2 * mp_pad * 4)                # epilogue temps
        # NOTE: w2t is grid-invariant; pl.Buffered(1) could drop one of these
        # two copies -- instead we simply account for both in the budget.
        fixed = 2 * cont_dim * mp_pad * 4
        tile_rows = max(row_mult, (budget - fixed) // per_row)
        tile_rows = min(tile_rows, 2048)            # diminishing returns past ~2K rows

    # Round to the sublane multiple and never exceed the (rounded-up) row count.
    tile_rows = max(row_mult, (int(tile_rows) // row_mult) * row_mult)
    tile_rows = min(tile_rows, _round_up(n_rows, row_mult))
    # On a multi-TC chip (v7x) keep at least one block per TensorCore.
    if num_tc > 1 and n_rows > num_tc * row_mult:
        per_core = _round_up(-(-n_rows // num_tc), row_mult)
        tile_rows = min(tile_rows, per_core)

    r2d = repres.reshape(n_rows, cont_dim)
    m2d = max_att.reshape(n_rows, cont_dim)

    # Precompute (weight**2)^T once, lane-padded to mp_pad (padded columns are
    # zero -> zero output there, sliced off below).
    w2t = (weight.astype(jnp.float32) ** 2).T                 # [D, mp_dim]
    if mp_pad != mp_dim:
        w2t = jnp.pad(w2t, ((0, 0), (0, mp_pad - mp_dim)))    # [D, mp_pad]

    grid = (pl.cdiv(n_rows, tile_rows),)

    out2d = pl.pallas_call(
        attematch_kernel,
        out_shape=jax.ShapeDtypeStruct((n_rows, mp_pad), repres.dtype),
        grid_spec=pltpu.PrefetchScalarGridSpec(
            num_scalar_prefetch=0,
            grid=grid,
            in_specs=[
                pl.BlockSpec((tile_rows, cont_dim), lambda i: (i, 0)),
                pl.BlockSpec((tile_rows, cont_dim), lambda i: (i, 0)),
                pl.BlockSpec((cont_dim, mp_pad), lambda i: (0, 0)),   # resident
            ],
            out_specs=pl.BlockSpec((tile_rows, mp_pad), lambda i: (i, 0)),
        ),
        compiler_params=pltpu.CompilerParams(
            dimension_semantics=("parallel",),
            vmem_limit_bytes=int(vmem_limit)),
    )(r2d, m2d, w2t)

    # Lanes-only slice (rows are exact), kept adjacent to the reshape so XLA
    # fuses them into a single copy.
    return out2d[:, :mp_dim].reshape(bsz, sent_len, mp_dim)


def atte_match_lay_ref(repres, max_att, weight):
    """Pure-JAX reference (materializes the multi-perspective expansion)."""
    bsz, sent_len, cont_dim = repres.shape
    mp_dim = weight.shape[0]
    r = repres.reshape(-1, cont_dim)[:, None, :] * weight[None, :, :]
    m = max_att.reshape(-1, cont_dim)[:, None, :] * weight[None, :, :]
    eps = 1e-8
    num = jnp.sum(r * m, axis=-1)
    den = (jnp.maximum(jnp.linalg.norm(r, axis=-1), eps)
           * jnp.maximum(jnp.linalg.norm(m, axis=-1), eps))
    return (num / den).reshape(bsz, sent_len, mp_dim)


if __name__ == "__main__":
    # Small shapes consistent with the module's forward contract.
    bsz, sent_len, cont_dim, mp_dim = 2, 8, 32, 16

    key = jax.random.PRNGKey(0)
    k_r, k_m, k_w = jax.random.split(key, 3)
    repres = jax.random.normal(k_r, (bsz, sent_len, cont_dim), dtype=jnp.float32)
    max_att = jax.random.normal(k_m, (bsz, sent_len, cont_dim), dtype=jnp.float32)
    # Deterministic parameter init, matching weight.data.uniform_(-1.0, 1.0).
    weight = jax.random.uniform(k_w, (mp_dim, cont_dim),
                                minval=-1.0, maxval=1.0, dtype=jnp.float32)

    out = atte_match_lay(repres, max_att, weight)
    out = jax.block_until_ready(out)

    ref = atte_match_lay_ref(repres, max_att, weight)
    assert out.shape == (bsz, sent_len, mp_dim)
    # Tolerance loosened deliberately: default-precision TPU matmuls route f32
    # through bf16 MXU passes (~1e-3 relative error on the contraction).
    assert jnp.allclose(out, ref, atol=2e-3, rtol=2e-3)

    print("KERNEL_OK")
</pallas_src>

<mosaic_0001>
module attributes {stable_mosaic.version = 11 : i64} {
  func.func @attematch_kernel(%arg0: i32, %arg1: memref<16x32xf32, #tpu.memory_space<vmem>>, %arg2: memref<16x32xf32, #tpu.memory_space<vmem>>, %arg3: memref<32x128xf32, #tpu.memory_space<vmem>>, %arg4: memref<16x128xf32, #tpu.memory_space<vmem>>) attributes {dimension_semantics = [#tpu.dimension_semantics<parallel>], iteration_bounds = array<i64: 1>, scalar_prefetch = 0 : i64, scratch_operands = 0 : i64, tpu.core_type = #tpu.core_type<tc>, window_params = [{transform_indices = @transform_0, window_bounds = array<i64: 16, 32>}, {transform_indices = @transform_1, window_bounds = array<i64: 16, 32>}, {pipeline_mode = #tpu.pipeline_mode<synchronous>, transform_indices = @transform_2, window_bounds = array<i64: 32, 128>}, {transform_indices = @transform_3, window_bounds = array<i64: 16, 128>}]} {
    %c0 = arith.constant 0 : index
    %c0_0 = arith.constant 0 : index
    %0 = vector.load %arg1[%c0, %c0_0] : memref<16x32xf32, #tpu.memory_space<vmem>>, vector<16x32xf32>
    %c0_1 = arith.constant 0 : index
    %c0_2 = arith.constant 0 : index
    %1 = vector.load %arg2[%c0_1, %c0_2] : memref<16x32xf32, #tpu.memory_space<vmem>>, vector<16x32xf32>
    %c0_3 = arith.constant 0 : index
    %c0_4 = arith.constant 0 : index
    %2 = vector.load %arg3[%c0_3, %c0_4] : memref<32x128xf32, #tpu.memory_space<vmem>>, vector<32x128xf32>
    %3 = arith.mulf %0, %1 : vector<16x32xf32>
    %4 = arith.mulf %0, %0 : vector<16x32xf32>
    %5 = arith.mulf %1, %1 : vector<16x32xf32>
    %6 = tpu.concatenate %3, %4, %5 in 0 : vector<16x32xf32>, vector<16x32xf32>, vector<16x32xf32> -> vector<48x32xf32>
    %cst = arith.constant dense<0.000000e+00> : vector<48x128xf32>
    %7 = tpu.matmul %6, %2, %cst {dimension_numbers = #tpu.dot_dimension_numbers<[1], [0], [0], [1], [0, 0, 1, 1], [], []>} : vector<48x32xf32>, vector<32x128xf32>, vector<48x128xf32> -> vector<48x128xf32>
    %8 = vector.extract_strided_slice %7 {offsets = [0, 0], sizes = [16, 128], strides = [1, 1]} : vector<48x128xf32> to vector<16x128xf32>
    %9 = vector.extract_strided_slice %7 {offsets = [16, 0], sizes = [16, 128], strides = [1, 1]} : vector<48x128xf32> to vector<16x128xf32>
    %10 = vector.extract_strided_slice %7 {offsets = [32, 0], sizes = [16, 128], strides = [1, 1]} : vector<48x128xf32> to vector<16x128xf32>
    %cst_5 = arith.constant 1.000000e-16 : f32
    %11 = vector.broadcast %cst_5 : f32 to vector<16x128xf32>
    %12 = arith.maximumf %9, %11 : vector<16x128xf32>
    %13 = math.rsqrt %12 : vector<16x128xf32>
    %cst_6 = arith.constant 1.000000e-16 : f32
    %14 = vector.broadcast %cst_6 : f32 to vector<16x128xf32>
    %15 = arith.maximumf %10, %14 : vector<16x128xf32>
    %16 = math.rsqrt %15 : vector<16x128xf32>
    %17 = arith.mulf %13, %16 : vector<16x128xf32>
    %18 = arith.mulf %8, %17 : vector<16x128xf32>
    %c0_7 = arith.constant 0 : index
    %c0_8 = arith.constant 0 : index
    %19 = vector.load %arg4[%c0_7, %c0_8] : memref<16x128xf32, #tpu.memory_space<vmem>>, vector<16x128xf32>
    tpu.vector_store %arg4[%c0_7, %c0_8], %18 {strides = array<i32>} : memref<16x128xf32, #tpu.memory_space<vmem>>, vector<16x128xf32>,
    return
  }
  func.func @transform_0(%arg0: i32) -> (i32, i32) {
    %c0_i32 = arith.constant 0 : i32
    %c0_i32_0 = arith.constant 0 : i32
    return %arg0, %c0_i32 : i32, i32
  }
  func.func @transform_1(%arg0: i32) -> (i32, i32) {
    %c0_i32 = arith.constant 0 : i32
    %c0_i32_0 = arith.constant 0 : i32
    return %arg0, %c0_i32 : i32, i32
  }
  func.func @transform_2(%arg0: i32) -> (i32, i32) {
    %c0_i32 = arith.constant 0 : i32
    %c0_i32_0 = arith.constant 0 : i32
    %c0_i32_1 = arith.constant 0 : i32
    return %c0_i32, %c0_i32_0 : i32, i32
  }
  func.func @transform_3(%arg0: i32) -> (i32, i32) {
    %c0_i32 = arith.constant 0 : i32
    %c0_i32_0 = arith.constant 0 : i32
    return %arg0, %c0_i32 : i32, i32
  }
}

</mosaic_0001>

<llo_original>
// kernel: tpu_custom_call.1
$region0: #{tpu_custom_call.1}
  #allocation0 [shape = 'u32[]', space=smem, size = 0x4, offset = 0x4, fixed_abs, tag = 'smem constant byte address 0x4 - core index']
  #allocation1 [shape = 'u32[144,128]{1,0:T(1,128)}', space=vmem, size = 0x12000, scoped, tag = 'internal scratch']
  %s0 = inlined_call_operand.hbm [shape: f32[16,32], index: 0, kind: input, shape index: {}]
  %s1 = inlined_call_operand.hbm [shape: f32[16,32], index: 1, kind: input, shape index: {}]
  %s2 = inlined_call_operand.hbm [shape: f32[32,128], index: 2, kind: input, shape index: {}]
  %s3 = inlined_call_operand.hbm [shape: f32[16,128], index: 3, kind: output, shape index: {}]
  %s4 = sld [smem:[#allocation0]]
  $region34: #{tpu_custom_call.1} parent=0
    _
  %s6 = ssub.s32 1, %s4
  %s7 = scalar_select 0, %s6, %s4
  $region1: #{tpu_custom_call.1} parent=0
    #allocation2 [shape = 'u8[8192]{0}', space=vmem, size = 0x2000, scoped, tag = 'input window, operand 0, single buffered']
    #allocation3 [shape = 's32[1]{0}', space=sflag, size = 0x4, scoped, tag = 'scoped memory for tpu_custom_call.1']
    #allocation4 [shape = 's32[1]{0}', space=sflag, size = 0x4, scoped, tag = 'scoped memory for tpu_custom_call.1']
    #allocation5 [shape = 'u8[8192]{0}', space=vmem, size = 0x2000, scoped, tag = 'input window, operand 1, single buffered']
    #allocation6 [shape = 's32[1]{0}', space=sflag, size = 0x4, scoped, tag = 'scoped memory for tpu_custom_call.1']
    #allocation7 [shape = 'u8[16384]{0}', space=vmem, size = 0x4000, scoped, tag = 'input window, operand 2, single buffered']
    #allocation8 [shape = 'u8[8192]{0}', space=vmem, size = 0x2000, scoped, tag = 'output window, operand 0, single buffered']
    %8 = vsyncpa [#allocation3], 0
    %9 = vsyncpa [#allocation6], 0
    %10 = vsyncpa [#allocation4], 0
    // Predicated region
    $region2: #{tpu_custom_call.1} parent=1 // pred_check
      _
    $region3: #{tpu_custom_call.1} parent=1 // pred_check_branch
      %12 = sbr.rel (0) target = $region5
    $region4: #{tpu_custom_call.1} parent=1 // pred_region
      %s14 = ssub.s32 256, 256
      %15 = vsyncadd [#allocation3], %s14
      %s16 = sshll.u32 [#allocation2], 4
      %s17 = int_to_ptr.vmem [resolvable:$true] %s16
      %22 = dma.hbm_to_vmem [thread:$0]  %s0, 256, %s17, [#allocation3], 128, 128, 8
    $region5: #{tpu_custom_call.1} parent=1 // pred_fallthru
      _
    // Predicated region
    $region6: #{tpu_custom_call.1} parent=1 // pred_check
      _
    $region7: #{tpu_custom_call.1} parent=1 // pred_check_branch
      %24 = sbr.rel (0) target = $region9
    $region8: #{tpu_custom_call.1} parent=1 // pred_region
      %s26 = ssub.s32 256, 256
      %27 = vsyncadd [#allocation6], %s26
      %s28 = sshll.u32 [#allocation5], 4
      %s29 = int_to_ptr.vmem [resolvable:$true] %s28
      %34 = dma.hbm_to_vmem [thread:$0]  %s1, 256, %s29, [#allocation6], 128, 128, 8
    $region9: #{tpu_custom_call.1} parent=1 // pred_fallthru
      _
    // Predicated region
    $region10: #{tpu_custom_call.1} parent=1 // pred_check
      _
    $region11: #{tpu_custom_call.1} parent=1 // pred_check_branch
      %36 = sbr.rel (0) target = $region13
    $region12: #{tpu_custom_call.1} parent=1 // pred_region
      %s38 = ssub.s32 512, 512
      %39 = vsyncadd [#allocation6], %s38
      %s40 = sshll.u32 [#allocation7], 4
      %s41 = int_to_ptr.vmem [resolvable:$true] %s40
      %46 = dma.hbm_to_vmem [thread:$0]  %s2, 512, %s41, [#allocation6], 128, 128, 8
    $region13: #{tpu_custom_call.1} parent=1 // pred_fallthru
      _
    // Predicated region
    $region14: #{tpu_custom_call.1} parent=1 // pred_check
      _
    $region15: #{tpu_custom_call.1} parent=1 // pred_check_branch
      %48 = sbr.rel (0) target = $region17
    $region16: #{tpu_custom_call.1} parent=1 // pred_region
      %49 = dma.done [#allocation3], 256
    $region17: #{tpu_custom_call.1} parent=1 // pred_fallthru
      _
    // Predicated region
    $region18: #{tpu_custom_call.1} parent=1 // pred_check
      _
    $region19: #{tpu_custom_call.1} parent=1 // pred_check_branch
      %51 = sbr.rel (0) target = $region21
    $region20: #{tpu_custom_call.1} parent=1 // pred_region
      %52 = dma.done [#allocation6], 256
    $region21: #{tpu_custom_call.1} parent=1 // pred_fallthru
      _
    // Predicated region
    $region22: #{tpu_custom_call.1} parent=1 // pred_check
      _
    $region23: #{tpu_custom_call.1} parent=1 // pred_check_branch
      %54 = sbr.rel (0) target = $region25
    $region24: #{tpu_custom_call.1} parent=1 // pred_region
      %55 = dma.done [#allocation6], 512
    $region25: #{tpu_custom_call.1} parent=1 // pred_fallthru
      _
    %v56 = vld [vmem:[#allocation2] sm:$0xff]
    %v57 = vld [vmem:[#allocation2 + $0x8] sm:$0xff]
    %v58 = vld [vmem:[#allocation5] sm:$0xff]
    %v59 = vld [vmem:[#allocation5 + $0x8] sm:$0xff]
    %v60 = vld [vmem:[#allocation7] sm:$0xff]
    %v61 = vld [vmem:[#allocation7 + $0x8] sm:$0xff]
    %v62 = vld [vmem:[#allocation7 + $0x10] sm:$0xff]
    %v63 = vld [vmem:[#allocation7 + $0x18] sm:$0xff]
    %v64 = vmul.f32 %v56, %v58
    %v65 = vmul.f32 %v57, %v59
    %v66 = vmul.f32 %v56, %v56
    %v67 = vmul.f32 %v57, %v57
    %v68 = vmul.f32 %v58, %v58
    %v69 = vmul.f32 %v59, %v59
    %vm70 = vcmask 261120
    %v72 = vsel %vm70, %v64, 0
    %v75 = vsel %vm70, %v65, 0
    %v78 = vsel %vm70, %v66, 0
    %v81 = vsel %vm70, %v67, 0
    %v84 = vsel %vm70, %v68, 0
    %v87 = vsel %vm70, %v69, 0
    %89 = vmatprep.subr.mxu0 0.0
    %90 = vmatpush1.msra.mxu0 0.0
    %91 = vmatprep.subr.mxu0 0.0
    %92 = vmatpush1.msra.mxu0 0.0
    %93 = vmatprep.subr.mxu0 0.0
    %94 = vmatpush1.msra.mxu0 0.0
    %95 = vmatprep.subr.mxu0 0.0
    %96 = vmatpush1.msra.mxu0 0.0
    %97 = vmatprep.subr.mxu0 0.0
    %98 = vmatpush1.msra.mxu0 0.0
    %99 = vmatprep.subr.mxu0 0.0
    %100 = vmatpush1.msra.mxu0 0.0
    %101 = vmatprep.subr.mxu0 0.0
    %102 = vmatpush1.msra.mxu0 0.0
    %103 = vmatprep.subr.mxu0 0.0
    %104 = vmatpush1.msra.mxu0 0.0
    %105 = vmatprep.subr.mxu0 0.0
    %106 = vmatpush1.msra.mxu0 0.0
    %107 = vmatprep.subr.mxu0 0.0
    %108 = vmatpush1.msra.mxu0 0.0
    %109 = vmatprep.subr.mxu0 0.0
    %110 = vmatpush1.msra.mxu0 0.0
    %111 = vmatprep.subr.mxu0 0.0
    %112 = vmatpush1.msra.mxu0 0.0
    %113 = vmatprep.subr.mxu0 0.0
    %114 = vmatpush1.msra.mxu0 %v63
    %115 = vmatprep.subr.mxu0 0.0
    %116 = vmatpush1.msra.mxu0 %v62
    %117 = vmatprep.subr.mxu0 0.0
    %118 = vmatpush1.msra.mxu0 %v61
    %119 = vmatprep.subr.mxu0 0.0
    %120 = vmatpush1.msra.mxu0 %v60
    %121 = vmatprep.subr.mxu0 0.0
    %122 = vmatpush2.msra.mxu0 0.0
    %123 = vmatprep.subr.mxu0 0.0
    %124 = vmatpush2.msra.mxu0 0.0
    %125 = vmatprep.subr.mxu0 0.0
    %126 = vmatpush2.msra.mxu0 0.0
    %127 = vmatprep.subr.mxu0 0.0
    %128 = vmatpush2.msra.mxu0 0.0
    %129 = vmatprep.subr.mxu0 0.0
    %130 = vmatpush2.msra.mxu0 0.0
    %131 = vmatprep.subr.mxu0 0.0
    %132 = vmatpush2.msra.mxu0 0.0
    %133 = vmatprep.subr.mxu0 0.0
    %134 = vmatpush2.msra.mxu0 0.0
    %135 = vmatprep.subr.mxu0 0.0
    %136 = vmatpush2.msra.mxu0 0.0
    %137 = vmatprep.subr.mxu0 0.0
    %138 = vmatpush2.msra.mxu0 0.0
    %139 = vmatprep.subr.mxu0 0.0
    %140 = vmatpush2.msra.mxu0 0.0
    %141 = vmatprep.subr.mxu0 0.0
    %142 = vmatpush2.msra.mxu0 0.0
    %143 = vmatprep.subr.mxu0 0.0
    %144 = vmatpush2.msra.mxu0 0.0
    %145 = vmatprep.subr.mxu0 0.0
    %146 = vmatpush2.msra.mxu0 0.0
    %147 = vmatprep.subr.mxu0 0.0
    %148 = vmatpush2.msra.mxu0 0.0
    %149 = vmatprep.subr.mxu0 0.0
    %150 = vmatpush2.msra.mxu0 0.0
    %151 = vmatprep.subr.mxu0 0.0
    %152 = vmatpush2.msra.mxu0 0.0
    %153 = vmatprep.mubr.f32.mxu0 0.0
    %154 = vmatmul.mubr.f32.gmra.mxu0 %v72
    %v155 = vpop.f32.mrf.mxu0
    %v156 = vadd.f32 0.0, %v155
    %v157 = vpop.f32.mrf.mxu0
    %158 = vmatprep.mubr.f32.mxu0 0.0
    %159 = vmatmul.mubr.f32.gmra.mxu0 %v75
    %v160 = vpop.f32.mrf.mxu0
    %v161 = vadd.f32 0.0, %v160
    %v162 = vpop.f32.mrf.mxu0
    %163 = vmatprep.mubr.f32.mxu0 0.0
    %164 = vmatmul.mubr.f32.gmra.mxu0 %v78
    %v165 = vpop.f32.mrf.mxu0
    %v166 = vadd.f32 0.0, %v165
    %v167 = vpop.f32.mrf.mxu0
    %168 = vmatprep.mubr.f32.mxu0 0.0
    %169 = vmatmul.mubr.f32.gmra.mxu0 %v81
    %v170 = vpop.f32.mrf.mxu0
    %v171 = vadd.f32 0.0, %v170
    %v172 = vpop.f32.mrf.mxu0
    %173 = vmatprep.mubr.f32.mxu0 0.0
    %174 = vmatmul.mubr.f32.gmra.mxu0 %v84
    %v175 = vpop.f32.mrf.mxu0
    %v176 = vadd.f32 0.0, %v175
    %v177 = vpop.f32.mrf.mxu0
    %178 = vmatprep.mubr.f32.mxu0 0.0
    %179 = vmatmul.mubr.f32.gmra.mxu0 %v87
    %v180 = vpop.f32.mrf.mxu0
    %v181 = vadd.f32 0.0, %v180
    %v182 = vpop.f32.mrf.mxu0
    %183 = vdwg.mxu0
    %v184 = vmax.f32 %v166, 1e-16
    %v185 = vmax.f32 %v171, 1e-16
    %v186 = vrsqrt.pop %v184
    %v187 = vrsqrt.pop %v185
    %v188 = vmax.f32 %v176, 1e-16
    %v189 = vmax.f32 %v181, 1e-16
    %v190 = vrsqrt.pop %v188
    %v191 = vrsqrt.pop %v189
    %v192 = vmul.f32 %v186, %v190
    %v193 = vmul.f32 %v187, %v191
    %v194 = vmul.f32 %v156, %v192
    %v195 = vmul.f32 %v161, %v193
    %196 = vst [vmem:[#allocation8] sm:$0xff] %v194
    %197 = vst [vmem:[#allocation8 + $0x8] sm:$0xff] %v195
    // Predicated region
    $region26: #{tpu_custom_call.1} parent=1 // pred_check
      _
    $region27: #{tpu_custom_call.1} parent=1 // pred_check_branch
      %199 = sbr.rel (0) target = $region29
    $region28: #{tpu_custom_call.1} parent=1 // pred_region
      %s201 = ssub.s32 256, 256
      %202 = vsyncadd [#allocation4], %s201
      %s203 = sshll.u32 [#allocation8], 4
      %s204 = int_to_ptr.vmem [resolvable:$true] %s203
      %209 = dma.vmem_to_hbm [thread:$0]  %s204, 256, %s3, [#allocation4], 128, 128, 8
    $region29: #{tpu_custom_call.1} parent=1 // pred_fallthru
      _
    // Predicated region
    $region30: #{tpu_custom_call.1} parent=1 // pred_check
      _
    $region31: #{tpu_custom_call.1} parent=1 // pred_check_branch
      %211 = sbr.rel (0) target = $region33
    $region32: #{tpu_custom_call.1} parent=1 // pred_region
      %212 = dma.done [#allocation4], 256
    $region33: #{tpu_custom_call.1} parent=1 // pred_fallthru
      _
    %213 = vsyncpa [#allocation3], 1
    %214 = vsyncpa [#allocation6], 1
    %215 = vsyncpa [#allocation4], 1

</llo_original>
